<compile_context>
chip_gen: v7x
topology: tpu7x:2x2x1
jax: 0.10.0
libtpu: 0.0.40
codegen_flags: <defaults>
</compile_context>

<pallas_src>
import functools

import jax
import jax.numpy as jnp
from jax.experimental import pallas as pl
from jax.experimental.pallas import tpu as pltpu


_LANE = 128


def _sublane(dtype):
    bits = jnp.dtype(dtype).itemsize * 8
    return max(8, 256 // bits)          # f32 -> 8, bf16 -> 16, int8 -> 32


def _pad(n, m):
    return ((n + m - 1) // m) * m


def _tile_bytes(rows, cols, dtype):
    """VMEM bytes of a (rows, cols) tile after lane/sublane padding."""
    return (_pad(max(rows, 1), _sublane(dtype))
            * _pad(max(cols, 1), _LANE)
            * jnp.dtype(dtype).itemsize)


def _chip_config():
    """Generation-aware scoped-VMEM limit and minimum grid-step count."""
    vmem_cap = 128 * 1024 * 1024
    try:
        info = pltpu.get_tpu_info()
        vmem_cap = int(getattr(info, "vmem_capacity_bytes", vmem_cap))
    except Exception:  # no TPU info available: conservative defaults
        pass
    if vmem_cap <= 64 * 1024 * 1024:
        # v7x-class: 64 MiB VMEM per TensorCore, 2 TCs -> keep >= 2 balanced
        # "parallel" grid steps and a tighter scoped-VMEM limit.
        return {"vmem_limit": min(48 * 1024 * 1024, vmem_cap * 3 // 4),
                "min_grid_steps": 2}
    # v5e / v6e: single TensorCore, 128 MiB physical VMEM -> few big steps.
    return {"vmem_limit": min(96 * 1024 * 1024, vmem_cap * 3 // 4),
            "min_grid_steps": 1}


def _pick_block_b(batch, per_batch_bytes, budget_bytes, min_steps):
    """Largest divisor of `batch` whose per-step working set fits the budget,
    keeping at least `min_steps` grid steps when possible."""
    cap = max(1, min(batch, budget_bytes // max(per_batch_bytes, 1)))
    if min_steps > 1 and batch >= min_steps:
        cap = min(cap, batch // min_steps)
    for bb in range(cap, 0, -1):
        if batch % bb == 0:
            return bb
    return 1


def _normalize_mask(mask, B, Lq, Lk):
    """Mirror the PyTorch mask handling and return an int8 mask at its natural
    (un-broadcast) 3-D shape; axes of size 1 are broadcast inside the kernel."""
    if mask.ndim == 5:
        mask = jnp.swapaxes(mask, 2, 4)          # mirrors mask.transpose(2, 4)
    while mask.ndim > 3:
        assert mask.shape[0] == 1, "extra leading mask dims must be size 1"
        mask = mask[0]
    while mask.ndim < 3:
        mask = mask[None]
    mb, ml, mk = mask.shape
    assert mb in (1, B) and ml in (1, Lq) and mk in (1, Lk), (
        f"mask shape {mask.shape} not broadcastable to {(B, Lq, Lk)}")
    return mask.astype(jnp.int8)


def _sdpa_kernel(*refs, inv_temperature, scale_q, has_mask, emit_attn,
                 approx_recip):
    """One grid step: a (block_b, block_q) slab of queries vs the full keys."""
    q_ref, k_ref, v_ref = refs[0], refs[1], refs[2]
    idx = 3
    mask_ref = None
    if has_mask:
        mask_ref = refs[idx]
        idx += 1
    out_ref = refs[idx]
    idx += 1
    attn_ref = refs[idx] if emit_attn else None

    q = q_ref[...]                       # (Bb, bq, D)  native dtype -> MXU
    k = k_ref[...]                       # (Bb, Lk, D)
    v = v_ref[...]                       # (Bb, Lk, Dv)

    if scale_q:
        # Lk > D: scaling q touches Lq*D elements instead of Lq*Lk scores.
        q = q * inv_temperature          # static Python float -> immediate

    # scores = (q @ k^T) / T  -- contraction on the last dims, f32 accumulation.
    scores = jnp.einsum("bqd,bkd->bqk", q, k,
                        preferred_element_type=jnp.float32)
    if not scale_q:
        scores = scores * inv_temperature

    if mask_ref is not None:
        # masked_fill(mask, -1e9); mask tile broadcasts over size-1 axes.
        scores = jnp.where(mask_ref[...] != 0, -1000000000.0, scores)

    # numerically stable softmax along the key axis
    scores = scores - jnp.max(scores, axis=-1, keepdims=True)
    p = jnp.exp(scores)
    denom = jnp.sum(p, axis=-1, keepdims=True)
    p = p * pl.reciprocal(denom, approx=approx_recip)

    if attn_ref is not None:
        attn_ref[...] = p.astype(attn_ref.dtype)

    out = jnp.einsum("bqk,bkd->bqd", p.astype(v.dtype), v,
                     preferred_element_type=jnp.float32)
    out_ref[...] = out.astype(out_ref.dtype)


def scaled_dot_product_attention(q, k, v, mask=None, *, temperature=1.0,
                                 return_attn=True, block_b=None, block_q=None,
                                 approx_softmax_recip=False):
    """Pallas TPU forward of ScaledDotProductAttention.

    q: (B, Lq, D)   k: (B, Lk, D)   v: (B, Lk, Dv)
    mask: optional bool/int, broadcastable to (B, Lq, Lk); True => masked out.
          A 5-D mask gets axes 2 and 4 swapped, mirroring the PyTorch code.
    Returns (output, attn) if return_attn else output.
    """
    B, Lq, D = q.shape
    Bk, Lk, Dk = k.shape
    Bv, Lkv, Dv = v.shape
    assert D == Dk and Bk == B and Bv == B and Lkv == Lk

    inv_temperature = float(1.0 / float(temperature))
    scale_q = Lk > D

    has_mask = mask is not None
    if has_mask:
        mask = _normalize_mask(mask, B, Lq, Lk)
        mB, mLq, mLk = mask.shape

    cfg = _chip_config()
    vmem_limit = cfg["vmem_limit"]
    min_steps = cfg["min_grid_steps"]
    budget = vmem_limit // 3      # headroom for scratch, intermediates, spills

    # --- padding-aware per-batch-element VMEM estimate ------------------------
    odt = q.dtype
    per_batch = 2 * _tile_bytes(Lq, D, q.dtype)        # q   (double-buffered)
    per_batch += 2 * _tile_bytes(Lk, D, k.dtype)       # k
    per_batch += 2 * _tile_bytes(Lk, Dv, v.dtype)      # v
    per_batch += 2 * _tile_bytes(Lq, Dv, odt)          # out
    if return_attn:
        per_batch += 2 * _tile_bytes(Lq, Lk, odt)      # attn
    per_batch += _tile_bytes(Lq, Lk, jnp.float32)      # scores scratch (x1)
    const_bytes = 0
    if has_mask:
        mrows = Lq if mLq == Lq else 1
        mcols = Lk if mLk == Lk else 1
        mbytes = 2 * _tile_bytes(mrows, mcols, jnp.int8)
        if mB == B:
            per_batch += mbytes
        else:
            const_bytes += mbytes

    if block_b is None:
        block_b = _pick_block_b(B, per_batch,
                                max(budget - const_bytes, per_batch), min_steps)
    assert B % block_b == 0
    batch_steps = B // block_b

    # --- optional Lq tiling so a 2-TC chip gets >= 2 parallel steps ------------
    if block_q is None:
        block_q = Lq
        if min_steps > 1 and batch_steps < min_steps and Lq > 1:
            sub = 32 if (has_mask and mLq == Lq) else _sublane(q.dtype)
            for bq in range(Lq // min_steps, 0, -1):
                if Lq % bq == 0 and bq % sub == 0:
                    block_q = bq
                    break
    assert Lq % block_q == 0
    q_steps = Lq // block_q
    grid = (batch_steps, q_steps)

    kernel = functools.partial(
        _sdpa_kernel,
        inv_temperature=inv_temperature,
        scale_q=scale_q,
        has_mask=has_mask,
        emit_attn=return_attn,
        approx_recip=approx_softmax_recip,
    )

    in_specs = [
        pl.BlockSpec((block_b, block_q, D), lambda b, qi: (b, qi, 0)),
        pl.BlockSpec((block_b, Lk, D), lambda b, qi: (b, 0, 0)),
        pl.BlockSpec((block_b, Lk, Dv), lambda b, qi: (b, 0, 0)),
    ]
    inputs = [q, k, v]
    if has_mask:
        mb_blk = block_b if mB == B else 1
        mq_blk = block_q if mLq == Lq else 1
        use_b = (mB == B)
        use_q = (mLq == Lq)

        def mask_map(b, qi, _ub=use_b, _uq=use_q):
            return (b if _ub else 0, qi if _uq else 0, 0)

        in_specs.append(pl.BlockSpec((mb_blk, mq_blk, mLk), mask_map))
        inputs.append(mask)

    out_specs = [pl.BlockSpec((block_b, block_q, Dv), lambda b, qi: (b, qi, 0))]
    out_shape = [jax.ShapeDtypeStruct((B, Lq, Dv), q.dtype)]
    if return_attn:
        out_specs.append(
            pl.BlockSpec((block_b, block_q, Lk), lambda b, qi: (b, qi, 0)))
        out_shape.append(jax.ShapeDtypeStruct((B, Lq, Lk), q.dtype))

    results = pl.pallas_call(
        kernel,
        out_shape=tuple(out_shape),
        grid_spec=pltpu.PrefetchScalarGridSpec(
            num_scalar_prefetch=0,
            grid=grid,
            in_specs=in_specs,
            out_specs=tuple(out_specs),
        ),
        compiler_params=pltpu.CompilerParams(
            dimension_semantics=("parallel", "parallel"),
            vmem_limit_bytes=vmem_limit,
        ),
    )(*inputs)

    if return_attn:
        return results[0], results[1]
    return results[0]


def _reference(q, k, v, mask, temperature):
    q32, k32, v32 = (t.astype(jnp.float32) for t in (q, k, v))
    attn = jnp.einsum("bqd,bkd->bqk", q32 / temperature, k32)
    if mask is not None:
        attn = jnp.where(mask, -1000000000.0, attn)
    attn = jax.nn.softmax(attn, axis=-1)
    out = jnp.einsum("bqk,bkd->bqd", attn, v32)
    return out, attn


if __name__ == "__main__":
    key = jax.random.PRNGKey(0)
    kq, kk, kv, km, kp = jax.random.split(key, 5)

    B, Lq, Lk, D, Dv = 2, 8, 8, 32, 32
    temperature = float(D) ** 0.5

    q = jax.random.normal(kq, (B, Lq, D), dtype=jnp.float32)
    k = jax.random.normal(kk, (B, Lk, D), dtype=jnp.float32)
    v = jax.random.normal(kv, (B, Lk, Dv), dtype=jnp.float32)
    mask = jax.random.bernoulli(km, 0.2, (B, Lq, Lk))  # True => masked out

    # full (B, Lq, Lk) mask, f32
    out, attn = scaled_dot_product_attention(q, k, v, mask,
                                             temperature=temperature)
    out = jax.block_until_ready(out)
    attn = jax.block_until_ready(attn)
    out_ref, attn_ref = _reference(q, k, v, mask, temperature)
    assert jnp.allclose(out, out_ref, atol=1e-5, rtol=1e-5), "output mismatch"
    assert jnp.allclose(attn, attn_ref, atol=1e-5, rtol=1e-5), "attn mismatch"

    # key-padding mask kept at its natural (B, 1, Lk) shape (never broadcast in HBM)
    kp_mask = jax.random.bernoulli(kp, 0.3, (B, 1, Lk))
    out_kp, attn_kp = scaled_dot_product_attention(q, k, v, kp_mask,
                                                   temperature=temperature)
    jax.block_until_ready(out_kp)
    out_kp_ref, attn_kp_ref = _reference(q, k, v, kp_mask, temperature)
    assert jnp.allclose(out_kp, out_kp_ref, atol=1e-5, rtol=1e-5), "kp-mask output mismatch"
    assert jnp.allclose(attn_kp, attn_kp_ref, atol=1e-5, rtol=1e-5), "kp-mask attn mismatch"

    # 5-D mask path (mirrors PyTorch mask.transpose(2, 4))
    mask5 = jnp.swapaxes(mask[None, None], 2, 4)
    out5, attn5 = scaled_dot_product_attention(q, k, v, mask5,
                                               temperature=temperature)
    jax.block_until_ready(out5)
    assert jnp.allclose(out5, out_ref, atol=1e-5, rtol=1e-5), "5-D mask output mismatch"
    assert jnp.allclose(attn5, attn_ref, atol=1e-5, rtol=1e-5), "5-D mask attn mismatch"

    # mask=None path (no mask tensor materialized or DMA'd)
    out2, attn2 = scaled_dot_product_attention(q, k, v, None,
                                               temperature=temperature)
    jax.block_until_ready(out2)
    out2_ref, attn2_ref = _reference(q, k, v, None, temperature)
    assert jnp.allclose(out2, out2_ref, atol=1e-5, rtol=1e-5), "no-mask output mismatch"
    assert jnp.allclose(attn2, attn2_ref, atol=1e-5, rtol=1e-5), "no-mask attn mismatch"

    # output-only path (attn never written to HBM)
    out3 = scaled_dot_product_attention(q, k, v, mask, temperature=temperature,
                                        return_attn=False)
    jax.block_until_ready(out3)
    assert jnp.allclose(out3, out_ref, atol=1e-5, rtol=1e-5), "return_attn=False mismatch"

    # bf16 inputs: operands stay bf16 into the MXU, accumulation in f32
    qb, kb, vb = (t.astype(jnp.bfloat16) for t in (q, k, v))
    out4, attn4 = scaled_dot_product_attention(qb, kb, vb, mask,
                                               temperature=temperature)
    jax.block_until_ready(out4)
    out4_ref, _ = _reference(qb, kb, vb, mask, temperature)
    assert jnp.allclose(out4.astype(jnp.float32), out4_ref, atol=5e-2, rtol=5e-2), \
        "bf16 output mismatch"

    # approx-reciprocal softmax (EUP vrcp) -- looser tolerance
    out6, attn6 = scaled_dot_product_attention(q, k, v, mask,
                                               temperature=temperature,
                                               approx_softmax_recip=True)
    jax.block_until_ready(out6)
    assert jnp.allclose(out6, out_ref, atol=1e-2, rtol=1e-2), "approx-recip output mismatch"

    print("KERNEL_OK")
</pallas_src>

<mosaic_0001>
module attributes {stable_mosaic.version = 11 : i64} {
  func.func @_sdpa_kernel(%arg0: i32, %arg1: i32, %arg2: memref<2x8x32xf32, #tpu.memory_space<vmem>>, %arg3: memref<2x8x32xf32, #tpu.memory_space<vmem>>, %arg4: memref<2x8x32xf32, #tpu.memory_space<vmem>>, %arg5: memref<2x8x8xi8, #tpu.memory_space<vmem>>, %arg6: memref<2x8x32xf32, #tpu.memory_space<vmem>>, %arg7: memref<2x8x8xf32, #tpu.memory_space<vmem>>) attributes {dimension_semantics = [#tpu.dimension_semantics<parallel>, #tpu.dimension_semantics<parallel>], iteration_bounds = array<i64: 1, 1>, scalar_prefetch = 0 : i64, scratch_operands = 0 : i64, tpu.core_type = #tpu.core_type<tc>, window_params = [{transform_indices = @transform_0, window_bounds = array<i64: 2, 8, 32>}, {transform_indices = @transform_1, window_bounds = array<i64: 2, 8, 32>}, {transform_indices = @transform_2, window_bounds = array<i64: 2, 8, 32>}, {transform_indices = @transform_3, window_bounds = array<i64: 2, 8, 8>}, {transform_indices = @transform_4, window_bounds = array<i64: 2, 8, 32>}, {transform_indices = @transform_5, window_bounds = array<i64: 2, 8, 8>}]} {
    %c0 = arith.constant 0 : index
    %c0_0 = arith.constant 0 : index
    %c0_1 = arith.constant 0 : index
    %0 = vector.load %arg2[%c0, %c0_0, %c0_1] : memref<2x8x32xf32, #tpu.memory_space<vmem>>, vector<2x8x32xf32>
    %c0_2 = arith.constant 0 : index
    %c0_3 = arith.constant 0 : index
    %c0_4 = arith.constant 0 : index
    %1 = vector.load %arg3[%c0_2, %c0_3, %c0_4] : memref<2x8x32xf32, #tpu.memory_space<vmem>>, vector<2x8x32xf32>
    %c0_5 = arith.constant 0 : index
    %c0_6 = arith.constant 0 : index
    %c0_7 = arith.constant 0 : index
    %2 = vector.load %arg4[%c0_5, %c0_6, %c0_7] : memref<2x8x32xf32, #tpu.memory_space<vmem>>, vector<2x8x32xf32>
    "tpu.trace_start"() <{level = 10 : i32, message = "bqd,bkd->bqk"}> : () -> ()
    %cst = arith.constant dense<0.000000e+00> : vector<2x8x8xf32>
    %3 = tpu.matmul %0, %1, %cst {dimension_numbers = #tpu.dot_dimension_numbers<[2], [2], [1], [1], [0, 0, 0, 1, 1, 1], [0], [0]>} : vector<2x8x32xf32>, vector<2x8x32xf32>, vector<2x8x8xf32> -> vector<2x8x8xf32>
    "tpu.trace_stop"() : () -> ()
    %cst_8 = arith.constant 0.176776692 : f32
    %4 = vector.broadcast %cst_8 : f32 to vector<2x8x8xf32>
    %5 = arith.mulf %3, %4 : vector<2x8x8xf32>
    %c0_9 = arith.constant 0 : index
    %c0_10 = arith.constant 0 : index
    %c0_11 = arith.constant 0 : index
    %6 = vector.load %arg5[%c0_9, %c0_10, %c0_11] : memref<2x8x8xi8, #tpu.memory_space<vmem>>, vector<2x8x8xi8>
    %c0_i8 = arith.constant 0 : i8
    %7 = vector.broadcast %c0_i8 : i8 to vector<2x8x8xi8>
    %8 = arith.cmpi ne, %6, %7 : vector<2x8x8xi8>
    %cst_12 = arith.constant -1.000000e+09 : f32
    %9 = vector.broadcast %cst_12 : f32 to vector<2x8x8xf32>
    %10 = arith.select %8, %9, %5 : vector<2x8x8xi1>, vector<2x8x8xf32>
    %cst_13 = arith.constant dense<0xFF800000> : vector<2x8xf32>
    %11 = vector.multi_reduction <maximumf>, %10, %cst_13 [2] : vector<2x8x8xf32> to vector<2x8xf32>
    %12 = vector.shape_cast %11 : vector<2x8xf32> to vector<2x8x1xf32>
    %13 = vector.broadcast %12 : vector<2x8x1xf32> to vector<2x8x8xf32>
    %14 = arith.subf %10, %13 : vector<2x8x8xf32>
    %15 = math.exp %14 : vector<2x8x8xf32>
    %cst_14 = arith.constant dense<0.000000e+00> : vector<2x8xf32>
    %16 = vector.multi_reduction <add>, %15, %cst_14 [2] : vector<2x8x8xf32> to vector<2x8xf32>
    %17 = vector.shape_cast %16 : vector<2x8xf32> to vector<2x8x1xf32>
    %18 = tpu.reciprocal %17 : vector<2x8x1xf32> -> vector<2x8x1xf32>
    %19 = vector.broadcast %18 : vector<2x8x1xf32> to vector<2x8x8xf32>
    %20 = arith.mulf %15, %19 : vector<2x8x8xf32>
    %c0_15 = arith.constant 0 : index
    %c0_16 = arith.constant 0 : index
    %c0_17 = arith.constant 0 : index
    %21 = vector.load %arg7[%c0_15, %c0_16, %c0_17] : memref<2x8x8xf32, #tpu.memory_space<vmem>>, vector<2x8x8xf32>
    tpu.vector_store %arg7[%c0_15, %c0_16, %c0_17], %20 {strides = array<i32>} : memref<2x8x8xf32, #tpu.memory_space<vmem>>, vector<2x8x8xf32>,
    "tpu.trace_start"() <{level = 10 : i32, message = "bqk,bkd->bqd"}> : () -> ()
    %cst_18 = arith.constant dense<0.000000e+00> : vector<2x8x32xf32>
    %22 = tpu.matmul %20, %2, %cst_18 {dimension_numbers = #tpu.dot_dimension_numbers<[2], [1], [1], [2], [0, 0, 0, 1, 1, 2], [0], [0]>} : vector<2x8x8xf32>, vector<2x8x32xf32>, vector<2x8x32xf32> -> vector<2x8x32xf32>
    "tpu.trace_stop"() : () -> ()
    %c0_19 = arith.constant 0 : index
    %c0_20 = arith.constant 0 : index
    %c0_21 = arith.constant 0 : index
    %23 = vector.load %arg6[%c0_19, %c0_20, %c0_21] : memref<2x8x32xf32, #tpu.memory_space<vmem>>, vector<2x8x32xf32>
    tpu.vector_store %arg6[%c0_19, %c0_20, %c0_21], %22 {strides = array<i32>} : memref<2x8x32xf32, #tpu.memory_space<vmem>>, vector<2x8x32xf32>,
    return
  }
  func.func @transform_0(%arg0: i32, %arg1: i32) -> (i32, i32, i32) {
    %c0_i32 = arith.constant 0 : i32
    %c0_i32_0 = arith.constant 0 : i32
    return %arg0, %arg1, %c0_i32 : i32, i32, i32
  }
  func.func @transform_1(%arg0: i32, %arg1: i32) -> (i32, i32, i32) {
    %c0_i32 = arith.constant 0 : i32
    %c0_i32_0 = arith.constant 0 : i32
    %c0_i32_1 = arith.constant 0 : i32
    return %arg0, %c0_i32, %c0_i32_0 : i32, i32, i32
  }
  func.func @transform_2(%arg0: i32, %arg1: i32) -> (i32, i32, i32) {
    %c0_i32 = arith.constant 0 : i32
    %c0_i32_0 = arith.constant 0 : i32
    %c0_i32_1 = arith.constant 0 : i32
    return %arg0, %c0_i32, %c0_i32_0 : i32, i32, i32
  }
  func.func @transform_3(%arg0: i32, %arg1: i32) -> (i32, i32, i32) {
    %c0_i32 = arith.constant 0 : i32
    %c0_i32_0 = arith.constant 0 : i32
    return %arg0, %arg1, %c0_i32 : i32, i32, i32
  }
  func.func @transform_4(%arg0: i32, %arg1: i32) -> (i32, i32, i32) {
    %c0_i32 = arith.constant 0 : i32
    %c0_i32_0 = arith.constant 0 : i32
    return %arg0, %arg1, %c0_i32 : i32, i32, i32
  }
  func.func @transform_5(%arg0: i32, %arg1: i32) -> (i32, i32, i32) {
    %c0_i32 = arith.constant 0 : i32
    %c0_i32_0 = arith.constant 0 : i32
    return %arg0, %arg1, %c0_i32 : i32, i32, i32
  }
}

</mosaic_0001>

<llo_original>
// kernel: tpu_custom_call.1
$region0: #{tpu_custom_call.1}
  #allocation0 [shape = 'u32[]', space=smem, size = 0x4, offset = 0x4, fixed_abs, tag = 'smem constant byte address 0x4 - core index']
  #allocation1 [shape = 'u32[144,128]{1,0:T(1,128)}', space=vmem, size = 0x12000, scoped, tag = 'internal scratch']
  %s0 = inlined_call_operand.hbm [shape: f32[2,8,32], index: 0, kind: input, shape index: {}]
  %s1 = inlined_call_operand.hbm [shape: f32[2,8,32], index: 1, kind: input, shape index: {}]
  %s2 = inlined_call_operand.hbm [shape: f32[2,8,32], index: 2, kind: input, shape index: {}]
  %s3 = inlined_call_operand.hbm [shape: s8[2,8,8], index: 3, kind: input, shape index: {}]
  %s4 = inlined_call_operand.hbm [shape: f32[2,8,32], index: 4, kind: output, shape index: {0}]
  %s5 = inlined_call_operand.hbm [shape: f32[2,8,8], index: 5, kind: output, shape index: {1}]
  %6 = xla_tuple %s4, %s5
  %s7 = sld [smem:[#allocation0]]
  $region50: #{tpu_custom_call.1} parent=0
    _
  %s9 = ssub.s32 1, %s7
  %s10 = scalar_select 0, %s9, %s7
  $region1: #{tpu_custom_call.1} parent=0
    #allocation2 [shape = 'u8[8192]{0}', space=vmem, size = 0x2000, scoped, tag = 'input window, operand 0, single buffered']
    #allocation3 [shape = 's32[1]{0}', space=sflag, size = 0x4, scoped, tag = 'scoped memory for tpu_custom_call.1']
    #allocation4 [shape = 's32[1]{0}', space=sflag, size = 0x4, scoped, tag = 'scoped memory for tpu_custom_call.1']
    #allocation5 [shape = 'u8[8192]{0}', space=vmem, size = 0x2000, scoped, tag = 'input window, operand 1, single buffered']
    #allocation6 [shape = 's32[1]{0}', space=sflag, size = 0x4, scoped, tag = 'scoped memory for tpu_custom_call.1']
    #allocation7 [shape = 'u8[8192]{0}', space=vmem, size = 0x2000, scoped, tag = 'input window, operand 2, single buffered']
    #allocation8 [shape = 'u8[2048]{0}', space=vmem, size = 0x800, scoped, tag = 'input window, operand 3, single buffered']
    #allocation9 [shape = 's32[1]{0}', space=sflag, size = 0x4, scoped, tag = 'scoped memory for tpu_custom_call.1']
    #allocation10 [shape = 'u8[8192]{0}', space=vmem, size = 0x2000, scoped, tag = 'output window, operand 0, single buffered']
    #allocation11 [shape = 'u8[8192]{0}', space=vmem, size = 0x2000, scoped, tag = 'output window, operand 1, single buffered']
    #allocation12 [shape = 's32[1]{0}', space=sflag, size = 0x4, scoped, tag = 'scoped memory for tpu_custom_call.1']
    %11 = vsyncpa [#allocation3], 0
    %12 = vsyncpa [#allocation6], 0
    %13 = vsyncpa [#allocation9], 0
    %14 = vsyncpa [#allocation4], 0
    %15 = vsyncpa [#allocation12], 0
    // Predicated region
    $region2: #{tpu_custom_call.1} parent=1 // pred_check
      _
    $region3: #{tpu_custom_call.1} parent=1 // pred_check_branch
      %17 = sbr.rel (0) target = $region5
    $region4: #{tpu_custom_call.1} parent=1 // pred_region
      %s19 = ssub.s32 256, 256
      %20 = vsyncadd [#allocation3], %s19
      %s21 = sshll.u32 [#allocation2], 4
      %s22 = int_to_ptr.vmem [resolvable:$true] %s21
      %27 = dma.hbm_to_vmem [thread:$0]  %s0, 256, %s22, [#allocation3], 128, 128, 8
    $region5: #{tpu_custom_call.1} parent=1 // pred_fallthru
      _
    // Predicated region
    $region6: #{tpu_custom_call.1} parent=1 // pred_check
      _
    $region7: #{tpu_custom_call.1} parent=1 // pred_check_branch
      %29 = sbr.rel (0) target = $region9
    $region8: #{tpu_custom_call.1} parent=1 // pred_region
      %s31 = ssub.s32 256, 256
      %32 = vsyncadd [#allocation6], %s31
      %s33 = sshll.u32 [#allocation5], 4
      %s34 = int_to_ptr.vmem [resolvable:$true] %s33
      %39 = dma.hbm_to_vmem [thread:$0]  %s1, 256, %s34, [#allocation6], 128, 128, 8
    $region9: #{tpu_custom_call.1} parent=1 // pred_fallthru
      _
    // Predicated region
    $region10: #{tpu_custom_call.1} parent=1 // pred_check
      _
    $region11: #{tpu_custom_call.1} parent=1 // pred_check_branch
      %41 = sbr.rel (0) target = $region13
    $region12: #{tpu_custom_call.1} parent=1 // pred_region
      %s43 = ssub.s32 256, 256
      %44 = vsyncadd [#allocation6], %s43
      %s45 = sshll.u32 [#allocation7], 4
      %s46 = int_to_ptr.vmem [resolvable:$true] %s45
      %51 = dma.hbm_to_vmem [thread:$0]  %s2, 256, %s46, [#allocation6], 128, 128, 8
    $region13: #{tpu_custom_call.1} parent=1 // pred_fallthru
      _
    // Predicated region
    $region14: #{tpu_custom_call.1} parent=1 // pred_check
      _
    $region15: #{tpu_custom_call.1} parent=1 // pred_check_branch
      %53 = sbr.rel (0) target = $region17
    $region16: #{tpu_custom_call.1} parent=1 // pred_region
      %s55 = ssub.s32 64, 64
      %56 = vsyncadd [#allocation9], %s55
      %s57 = sshll.u32 [#allocation8], 4
      %s58 = int_to_ptr.vmem [resolvable:$true] %s57
      %63 = dma.hbm_to_vmem [thread:$0]  %s3, 64, %s58, [#allocation9], 32, 32, 2
    $region17: #{tpu_custom_call.1} parent=1 // pred_fallthru
      _
    // Predicated region
    $region18: #{tpu_custom_call.1} parent=1 // pred_check
      _
    $region19: #{tpu_custom_call.1} parent=1 // pred_check_branch
      %65 = sbr.rel (0) target = $region21
    $region20: #{tpu_custom_call.1} parent=1 // pred_region
      %66 = dma.done [#allocation3], 256
    $region21: #{tpu_custom_call.1} parent=1 // pred_fallthru
      _
    // Predicated region
    $region22: #{tpu_custom_call.1} parent=1 // pred_check
      _
    $region23: #{tpu_custom_call.1} parent=1 // pred_check_branch
      %68 = sbr.rel (0) target = $region25
    $region24: #{tpu_custom_call.1} parent=1 // pred_region
      %69 = dma.done [#allocation6], 256
    $region25: #{tpu_custom_call.1} parent=1 // pred_fallthru
      _
    // Predicated region
    $region26: #{tpu_custom_call.1} parent=1 // pred_check
      _
    $region27: #{tpu_custom_call.1} parent=1 // pred_check_branch
      %71 = sbr.rel (0) target = $region29
    $region28: #{tpu_custom_call.1} parent=1 // pred_region
      %72 = dma.done [#allocation6], 256
    $region29: #{tpu_custom_call.1} parent=1 // pred_fallthru
      _
    // Predicated region
    $region30: #{tpu_custom_call.1} parent=1 // pred_check
      _
    $region31: #{tpu_custom_call.1} parent=1 // pred_check_branch
      %74 = sbr.rel (0) target = $region33
    $region32: #{tpu_custom_call.1} parent=1 // pred_region
      %75 = dma.done [#allocation9], 64
    $region33: #{tpu_custom_call.1} parent=1 // pred_fallthru
      _
    %v78 = vld [vmem:[#allocation2] sm:$0xff]
    %v79 = vld [vmem:[#allocation2 + $0x8] sm:$0xff]
    %v80 = vld [vmem:[#allocation5] sm:$0xff]
    %v81 = vld [vmem:[#allocation5 + $0x8] sm:$0xff]
    %v82 = vld [vmem:[#allocation7] sm:$0xff]
    %v83 = vld [vmem:[#allocation7 + $0x8] sm:$0xff]
    %vm84 = vcmask 261120
    %v86 = vsel %vm84, %v78, 0
    %v89 = vsel %vm84, %v80, 0
    %91 = vmatprep.subr.mxu0 0.0
    %92 = vmatpush1.xpose.msra.mxu0 %v89
    %93 = vmatprep.subr.mxu0 0.0
    %94 = vmatpush1.xpose.msra.mxu0 0.0
    %95 = vmatprep.subr.mxu0 0.0
    %96 = vmatpush1.xpose.msra.mxu0 0.0
    %97 = vmatprep.subr.mxu0 0.0
    %98 = vmatpush1.xpose.msra.mxu0 0.0
    %99 = vmatprep.subr.mxu0 0.0
    %100 = vmatpush1.xpose.msra.mxu0 0.0
    %101 = vmatprep.subr.mxu0 0.0
    %102 = vmatpush1.xpose.msra.mxu0 0.0
    %103 = vmatprep.subr.mxu0 0.0
    %104 = vmatpush1.xpose.msra.mxu0 0.0
    %105 = vmatprep.subr.mxu0 0.0
    %106 = vmatpush1.xpose.msra.mxu0 0.0
    %107 = vmatprep.subr.mxu0 0.0
    %108 = vmatpush1.xpose.msra.mxu0 0.0
    %109 = vmatprep.subr.mxu0 0.0
    %110 = vmatpush1.xpose.msra.mxu0 0.0
    %111 = vmatprep.subr.mxu0 0.0
    %112 = vmatpush1.xpose.msra.mxu0 0.0
    %113 = vmatprep.subr.mxu0 0.0
    %114 = vmatpush1.xpose.msra.mxu0 0.0
    %115 = vmatprep.subr.mxu0 0.0
    %116 = vmatpush1.xpose.msra.mxu0 0.0
    %117 = vmatprep.subr.mxu0 0.0
    %118 = vmatpush1.xpose.msra.mxu0 0.0
    %119 = vmatprep.subr.mxu0 0.0
    %120 = vmatpush1.xpose.msra.mxu0 0.0
    %121 = vmatprep.subr.mxu0 0.0
    %122 = vmatpush1.xpose.msra.mxu0 0.0
    %123 = vmatprep.subr.mxu0 0.0
    %124 = vmatpush1.xpose.msra.mxu0 0.0
    %125 = vmatprep.subr.mxu0 0.0
    %126 = vmatpush1.xpose.msra.mxu0 0.0
    %127 = vmatprep.subr.mxu0 0.0
    %128 = vmatpush1.xpose.msra.mxu0 0.0
    %129 = vmatprep.subr.mxu0 0.0
    %130 = vmatpush1.xpose.msra.mxu0 0.0
    %131 = vmatprep.subr.mxu0 0.0
    %132 = vmatpush1.xpose.msra.mxu0 0.0
    %133 = vmatprep.subr.mxu0 0.0
    %134 = vmatpush1.xpose.msra.mxu0 0.0
    %135 = vmatprep.subr.mxu0 0.0
    %136 = vmatpush1.xpose.msra.mxu0 0.0
    %137 = vmatprep.subr.mxu0 0.0
    %138 = vmatpush1.xpose.msra.mxu0 0.0
    %139 = vmatprep.subr.mxu0 0.0
    %140 = vmatpush1.xpose.msra.mxu0 0.0
    %141 = vmatprep.subr.mxu0 0.0
    %142 = vmatpush1.xpose.msra.mxu0 0.0
    %143 = vmatprep.subr.mxu0 0.0
    %144 = vmatpush1.xpose.msra.mxu0 0.0
    %145 = vmatprep.subr.mxu0 0.0
    %146 = vmatpush1.xpose.msra.mxu0 0.0
    %147 = vmatprep.subr.mxu0 0.0
    %148 = vmatpush1.xpose.msra.mxu0 0.0
    %149 = vmatprep.subr.mxu0 0.0
    %150 = vmatpush1.xpose.msra.mxu0 0.0
    %151 = vmatprep.subr.mxu0 0.0
    %152 = vmatpush1.xpose.msra.mxu0 0.0
    %153 = vmatprep.subr.mxu0 0.0
    %154 = vmatpush1.xpose.msra.mxu0 0.0
    %155 = vmatprep.mubr.f32.mxu0 0.0
    %156 = vmatmul.mubr.f32.gmra.mrb[0].mxu0 %v86
    %v157 = vpop.f32.mrb[0].mxu0
    %v158 = vadd.f32 0.0, %v157
    %v159 = vpop.f32.mrb[0].mxu0
    %160 = vdwg.mxu0
    %v162 = vsel %vm84, %v79, 0
    %v165 = vsel %vm84, %v81, 0
    %167 = vmatprep.subr.mxu0 0.0
    %168 = vmatpush1.xpose.msra.mxu0 %v165
    %169 = vmatprep.subr.mxu0 0.0
    %170 = vmatpush1.xpose.msra.mxu0 0.0
    %171 = vmatprep.subr.mxu0 0.0
    %172 = vmatpush1.xpose.msra.mxu0 0.0
    %173 = vmatprep.subr.mxu0 0.0
    %174 = vmatpush1.xpose.msra.mxu0 0.0
    %175 = vmatprep.subr.mxu0 0.0
    %176 = vmatpush1.xpose.msra.mxu0 0.0
    %177 = vmatprep.subr.mxu0 0.0
    %178 = vmatpush1.xpose.msra.mxu0 0.0
    %179 = vmatprep.subr.mxu0 0.0
    %180 = vmatpush1.xpose.msra.mxu0 0.0
    %181 = vmatprep.subr.mxu0 0.0
    %182 = vmatpush1.xpose.msra.mxu0 0.0
    %183 = vmatprep.subr.mxu0 0.0
    %184 = vmatpush1.xpose.msra.mxu0 0.0
    %185 = vmatprep.subr.mxu0 0.0
    %186 = vmatpush1.xpose.msra.mxu0 0.0
    %187 = vmatprep.subr.mxu0 0.0
    %188 = vmatpush1.xpose.msra.mxu0 0.0
    %189 = vmatprep.subr.mxu0 0.0
    %190 = vmatpush1.xpose.msra.mxu0 0.0
    %191 = vmatprep.subr.mxu0 0.0
    %192 = vmatpush1.xpose.msra.mxu0 0.0
    %193 = vmatprep.subr.mxu0 0.0
    %194 = vmatpush1.xpose.msra.mxu0 0.0
    %195 = vmatprep.subr.mxu0 0.0
    %196 = vmatpush1.xpose.msra.mxu0 0.0
    %197 = vmatprep.subr.mxu0 0.0
    %198 = vmatpush1.xpose.msra.mxu0 0.0
    %199 = vmatprep.subr.mxu0 0.0
    %200 = vmatpush1.xpose.msra.mxu0 0.0
    %201 = vmatprep.subr.mxu0 0.0
    %202 = vmatpush1.xpose.msra.mxu0 0.0
    %203 = vmatprep.subr.mxu0 0.0
    %204 = vmatpush1.xpose.msra.mxu0 0.0
    %205 = vmatprep.subr.mxu0 0.0
    %206 = vmatpush1.xpose.msra.mxu0 0.0
    %207 = vmatprep.subr.mxu0 0.0
    %208 = vmatpush1.xpose.msra.mxu0 0.0
    %209 = vmatprep.subr.mxu0 0.0
    %210 = vmatpush1.xpose.msra.mxu0 0.0
    %211 = vmatprep.subr.mxu0 0.0
    %212 = vmatpush1.xpose.msra.mxu0 0.0
    %213 = vmatprep.subr.mxu0 0.0
    %214 = vmatpush1.xpose.msra.mxu0 0.0
    %215 = vmatprep.subr.mxu0 0.0
    %216 = vmatpush1.xpose.msra.mxu0 0.0
    %217 = vmatprep.subr.mxu0 0.0
    %218 = vmatpush1.xpose.msra.mxu0 0.0
    %219 = vmatprep.subr.mxu0 0.0
    %220 = vmatpush1.xpose.msra.mxu0 0.0
    %221 = vmatprep.subr.mxu0 0.0
    %222 = vmatpush1.xpose.msra.mxu0 0.0
    %223 = vmatprep.subr.mxu0 0.0
    %224 = vmatpush1.xpose.msra.mxu0 0.0
    %225 = vmatprep.subr.mxu0 0.0
    %226 = vmatpush1.xpose.msra.mxu0 0.0
    %227 = vmatprep.subr.mxu0 0.0
    %228 = vmatpush1.xpose.msra.mxu0 0.0
    %229 = vmatprep.subr.mxu0 0.0
    %230 = vmatpush1.xpose.msra.mxu0 0.0
    %231 = vmatprep.mubr.f32.mxu0 0.0
    %232 = vmatmul.mubr.f32.gmra.mrb[0].mxu0 %v162
    %v233 = vpop.f32.mrb[0].mxu0
    %v234 = vadd.f32 0.0, %v233
    %v235 = vpop.f32.mrb[0].mxu0
    %236 = vdwg.mxu0
    %v237 = vmul.f32 %v158, 0.17677669
    %v238 = vmul.f32 %v234, 0.17677669
    %v239 = vld [vmem:[#allocation8] sm:$0x3]
    %v240 = vld [vmem:[#allocation8 + $0x2] sm:$0x3]
    %vm241 = vnez %v239
    %vm242 = vnez %v240
    %v243 = vsel %vm241, 16843009, 0
    %v244 = vsel %vm242, 16843009, 0
    %v245 = vunpack.c.0.s8 %v243
    %v246 = vunpack.c.0.s8 %v244
    %vm247 = vcmp.ne.s32.totalorder %v245, 0
    %vm248 = vcmp.ne.s32.totalorder %v246, 0
    %v249 = vsel %vm247, -1e+09, %v237
    %v250 = vsel %vm248, -1e+09, %v238
    %vm251 = vcmask 64512
    %v252 = vsel %vm251, %v249, -inf
    %253 = vmax.xlane.f32.xlu0 %v252
    %v254 = vpop.xlane.xlu0 %253
    %v255 = vsel %vm251, %v250, -inf
    %256 = vmax.xlane.f32.xlu0 %v255
    %v257 = vpop.xlane.xlu0 %256
    %v258 = vsub.f32 %v249, %v254
    %v259 = vsub.f32 %v250, %v257
    %v260 = vmul.f32 %v258, 1.442695
    %v261 = vpow.pop %v260
    %v262 = vmul.f32 %v259, 1.442695
    %v263 = vpow.pop %v262
    %v264 = vsel %vm251, %v261, 0.0
    %265 = vadd.xlane.f32.xlu0 %v264
    %v266 = vpop.xlane.xlu0 %265
    %v267 = vsel %vm251, %v263, 0.0
    %268 = vadd.xlane.f32.xlu0 %v267
    %v269 = vpop.xlane.xlu0 %268
    %v270 = vrcp.pop %v266
    %v271 = vrcp.pop %v269
    %v272 = vmul.f32 %v261, %v270
    %v273 = vmul.f32 %v263, %v271
    %274 = vst.msk [vmem:[#allocation11] sm:$0xff] %vm251, %v272
    %275 = vst.msk [vmem:[#allocation11 + $0x8] sm:$0xff] %vm251, %v273
    %v277 = vsel %vm251, %v272, 0
    %279 = vmatprep.subr.mxu0 0.0
    %280 = vmatpush1.msra.mxu0 %v82
    %281 = vmatprep.subr.mxu0 0.0
    %282 = vmatpush1.msra.mxu0 0.0
    %283 = vmatprep.subr.mxu0 0.0
    %284 = vmatpush1.msra.mxu0 0.0
    %285 = vmatprep.subr.mxu0 0.0
    %286 = vmatpush1.msra.mxu0 0.0
    %287 = vmatprep.subr.mxu0 0.0
    %288 = vmatpush1.msra.mxu0 0.0
    %289 = vmatprep.subr.mxu0 0.0
    %290 = vmatpush1.msra.mxu0 0.0
    %291 = vmatprep.subr.mxu0 0.0
    %292 = vmatpush1.msra.mxu0 0.0
    %293 = vmatprep.subr.mxu0 0.0
    %294 = vmatpush1.msra.mxu0 0.0
    %295 = vmatprep.subr.mxu0 0.0
    %296 = vmatpush1.msra.mxu0 0.0
    %297 = vmatprep.subr.mxu0 0.0
    %298 = vmatpush1.msra.mxu0 0.0
    %299 = vmatprep.subr.mxu0 0.0
    %300 = vmatpush1.msra.mxu0 0.0
    %301 = vmatprep.subr.mxu0 0.0
    %302 = vmatpush1.msra.mxu0 0.0
    %303 = vmatprep.subr.mxu0 0.0
    %304 = vmatpush1.msra.mxu0 0.0
    %305 = vmatprep.subr.mxu0 0.0
    %306 = vmatpush1.msra.mxu0 0.0
    %307 = vmatprep.subr.mxu0 0.0
    %308 = vmatpush1.msra.mxu0 0.0
    %309 = vmatprep.subr.mxu0 0.0
    %310 = vmatpush1.msra.mxu0 0.0
    %311 = vmatprep.subr.mxu0 0.0
    %312 = vmatpush1.msra.mxu0 0.0
    %313 = vmatprep.subr.mxu0 0.0
    %314 = vmatpush1.msra.mxu0 0.0
    %315 = vmatprep.subr.mxu0 0.0
    %316 = vmatpush1.msra.mxu0 0.0
    %317 = vmatprep.subr.mxu0 0.0
    %318 = vmatpush1.msra.mxu0 0.0
    %319 = vmatprep.subr.mxu0 0.0
    %320 = vmatpush1.msra.mxu0 0.0
    %321 = vmatprep.subr.mxu0 0.0
    %322 = vmatpush1.msra.mxu0 0.0
    %323 = vmatprep.subr.mxu0 0.0
    %324 = vmatpush1.msra.mxu0 0.0
    %325 = vmatprep.subr.mxu0 0.0
    %326 = vmatpush1.msra.mxu0 0.0
    %327 = vmatprep.subr.mxu0 0.0
    %328 = vmatpush1.msra.mxu0 0.0
    %329 = vmatprep.subr.mxu0 0.0
    %330 = vmatpush1.msra.mxu0 0.0
    %331 = vmatprep.subr.mxu0 0.0
    %332 = vmatpush1.msra.mxu0 0.0
    %333 = vmatprep.subr.mxu0 0.0
    %334 = vmatpush1.msra.mxu0 0.0
    %335 = vmatprep.subr.mxu0 0.0
    %336 = vmatpush1.msra.mxu0 0.0
    %337 = vmatprep.subr.mxu0 0.0
    %338 = vmatpush1.msra.mxu0 0.0
    %339 = vmatprep.subr.mxu0 0.0
    %340 = vmatpush1.msra.mxu0 0.0
    %341 = vmatprep.subr.mxu0 0.0
    %342 = vmatpush1.msra.mxu0 0.0
    %343 = vmatprep.mubr.f32.mxu0 0.0
    %344 = vmatmul.mubr.f32.gmra.mrb[0].mxu0 %v277
    %v345 = vpop.f32.mrb[0].mxu0
    %v346 = vadd.f32 0.0, %v345
    %v347 = vpop.f32.mrb[0].mxu0
    %348 = vdwg.mxu0
    %v350 = vsel %vm251, %v273, 0
    %352 = vmatprep.subr.mxu0 0.0
    %353 = vmatpush1.msra.mxu0 %v83
    %354 = vmatprep.subr.mxu0 0.0
    %355 = vmatpush1.msra.mxu0 0.0
    %356 = vmatprep.subr.mxu0 0.0
    %357 = vmatpush1.msra.mxu0 0.0
    %358 = vmatprep.subr.mxu0 0.0
    %359 = vmatpush1.msra.mxu0 0.0
    %360 = vmatprep.subr.mxu0 0.0
    %361 = vmatpush1.msra.mxu0 0.0
    %362 = vmatprep.subr.mxu0 0.0
    %363 = vmatpush1.msra.mxu0 0.0
    %364 = vmatprep.subr.mxu0 0.0
    %365 = vmatpush1.msra.mxu0 0.0
    %366 = vmatprep.subr.mxu0 0.0
    %367 = vmatpush1.msra.mxu0 0.0
    %368 = vmatprep.subr.mxu0 0.0
    %369 = vmatpush1.msra.mxu0 0.0
    %370 = vmatprep.subr.mxu0 0.0
    %371 = vmatpush1.msra.mxu0 0.0
    %372 = vmatprep.subr.mxu0 0.0
    %373 = vmatpush1.msra.mxu0 0.0
    %374 = vmatprep.subr.mxu0 0.0
    %375 = vmatpush1.msra.mxu0 0.0
    %376 = vmatprep.subr.mxu0 0.0
    %377 = vmatpush1.msra.mxu0 0.0
    %378 = vmatprep.subr.mxu0 0.0
    %379 = vmatpush1.msra.mxu0 0.0
    %380 = vmatprep.subr.mxu0 0.0
    %381 = vmatpush1.msra.mxu0 0.0
    %382 = vmatprep.subr.mxu0 0.0
    %383 = vmatpush1.msra.mxu0 0.0
    %384 = vmatprep.subr.mxu0 0.0
    %385 = vmatpush1.msra.mxu0 0.0
    %386 = vmatprep.subr.mxu0 0.0
    %387 = vmatpush1.msra.mxu0 0.0
    %388 = vmatprep.subr.mxu0 0.0
    %389 = vmatpush1.msra.mxu0 0.0
    %390 = vmatprep.subr.mxu0 0.0
    %391 = vmatpush1.msra.mxu0 0.0
    %392 = vmatprep.subr.mxu0 0.0
    %393 = vmatpush1.msra.mxu0 0.0
    %394 = vmatprep.subr.mxu0 0.0
    %395 = vmatpush1.msra.mxu0 0.0
    %396 = vmatprep.subr.mxu0 0.0
    %397 = vmatpush1.msra.mxu0 0.0
    %398 = vmatprep.subr.mxu0 0.0
    %399 = vmatpush1.msra.mxu0 0.0
    %400 = vmatprep.subr.mxu0 0.0
    %401 = vmatpush1.msra.mxu0 0.0
    %402 = vmatprep.subr.mxu0 0.0
    %403 = vmatpush1.msra.mxu0 0.0
    %404 = vmatprep.subr.mxu0 0.0
    %405 = vmatpush1.msra.mxu0 0.0
    %406 = vmatprep.subr.mxu0 0.0
    %407 = vmatpush1.msra.mxu0 0.0
    %408 = vmatprep.subr.mxu0 0.0
    %409 = vmatpush1.msra.mxu0 0.0
    %410 = vmatprep.subr.mxu0 0.0
    %411 = vmatpush1.msra.mxu0 0.0
    %412 = vmatprep.subr.mxu0 0.0
    %413 = vmatpush1.msra.mxu0 0.0
    %414 = vmatprep.subr.mxu0 0.0
    %415 = vmatpush1.msra.mxu0 0.0
    %416 = vmatprep.mubr.f32.mxu0 0.0
    %417 = vmatmul.mubr.f32.gmra.mrb[0].mxu0 %v350
    %v418 = vpop.f32.mrb[0].mxu0
    %v419 = vadd.f32 0.0, %v418
    %v420 = vpop.f32.mrb[0].mxu0
    %421 = vdwg.mxu0
    %422 = vst.msk [vmem:[#allocation10] sm:$0xff] %vm84, %v346
    %423 = vst.msk [vmem:[#allocation10 + $0x8] sm:$0xff] %vm84, %v419
    // Predicated region
    $region34: #{tpu_custom_call.1} parent=1 // pred_check
      _
    $region35: #{tpu_custom_call.1} parent=1 // pred_check_branch
      %425 = sbr.rel (0) target = $region37
    $region36: #{tpu_custom_call.1} parent=1 // pred_region
      %s427 = ssub.s32 256, 256
      %428 = vsyncadd [#allocation4], %s427
      %s429 = sshll.u32 [#allocation10], 4
      %s430 = int_to_ptr.vmem [resolvable:$true] %s429
      %435 = dma.vmem_to_hbm [thread:$0]  %s430, 256, %s4, [#allocation4], 128, 128, 8
    $region37: #{tpu_custom_call.1} parent=1 // pred_fallthru
      _
    // Predicated region
    $region38: #{tpu_custom_call.1} parent=1 // pred_check
      _
    $region39: #{tpu_custom_call.1} parent=1 // pred_check_branch
      %437 = sbr.rel (0) target = $region41
    $region40: #{tpu_custom_call.1} parent=1 // pred_region
      %s439 = ssub.s32 256, 256
      %440 = vsyncadd [#allocation12], %s439
      %s441 = sshll.u32 [#allocation11], 4
      %s442 = int_to_ptr.vmem [resolvable:$true] %s441
      %447 = dma.vmem_to_hbm [thread:$0]  %s442, 256, %s5, [#allocation12], 128, 128, 8
    $region41: #{tpu_custom_call.1} parent=1 // pred_fallthru
      _
    // Predicated region
    $region42: #{tpu_custom_call.1} parent=1 // pred_check
      _
    $region43: #{tpu_custom_call.1} parent=1 // pred_check_branch
      %449 = sbr.rel (0) target = $region45
    $region44: #{tpu_custom_call.1} parent=1 // pred_region
      %450 = dma.done [#allocation4], 256
    $region45: #{tpu_custom_call.1} parent=1 // pred_fallthru
      _
    // Predicated region
    $region46: #{tpu_custom_call.1} parent=1 // pred_check
      _
    $region47: #{tpu_custom_call.1} parent=1 // pred_check_branch
      %452 = sbr.rel (0) target = $region49
    $region48: #{tpu_custom_call.1} parent=1 // pred_region
      %453 = dma.done [#allocation12], 256
    $region49: #{tpu_custom_call.1} parent=1 // pred_fallthru
      _
    %454 = vsyncpa [#allocation3], 1
    %455 = vsyncpa [#allocation6], 1
    %456 = vsyncpa [#allocation9], 1
    %457 = vsyncpa [#allocation4], 1
    %458 = vsyncpa [#allocation12], 1

</llo_original>
